<compile_context>
chip_gen: v7x
topology: tpu7x:2x2x1
jax: 0.10.0
libtpu: 0.0.40
codegen_flags: <defaults>
</compile_context>

<pallas_src>
import functools
import math

import jax
import jax.numpy as jnp
from jax.experimental import pallas as pl
from jax.experimental.pallas import tpu as pltpu


def _ceil_to(v, m):
    return -(-v // m) * m


def rowcol_attention_kernel(x_ref, wqkv_ref, wo_ref, bo_ref, o_ref, acc_ref,
                            *, n_tokens, compute_dtype):
    # x_ref:    (rows, dim)               token-row tile, resident across heads
    # wqkv_ref: (heads, dim, 3*dim_head)  fused per-head [Wq|Wk|Wv] (VMEM-resident)
    # wo_ref:   (heads, dim_head, dim)    per-head slab of the output projection
    # bo_ref:   (1, dim)                  output bias (f32)
    # o_ref:    (rows, dim)
    # acc_ref:  (rows, dim) f32 VMEM accumulator
    hh = pl.program_id(1)

    @pl.when(hh == 0)
    def _init():
        # Seed the accumulator with the broadcast bias (drops the finalize add).
        acc_ref[...] = jnp.broadcast_to(
            bo_ref[...].astype(jnp.float32), acc_ref.shape)

    rows, _ = x_ref.shape
    d = wo_ref.shape[1]                    # dim_head
    bt = rows // n_tokens

    x2 = x_ref[...].astype(compute_dtype)  # (rows, dim)

    # One fused per-head projection (MXU N-fill = 3*dim_head, not dim_head).
    # The softmax scale is pre-folded into the Wq columns in the wrapper.
    qkv = jnp.dot(x2, wqkv_ref[hh], preferred_element_type=jnp.float32)  # (rows, 3d)
    q = qkv[:, 0 * d:1 * d].reshape(bt, n_tokens, d)
    k = qkv[:, 1 * d:2 * d].reshape(bt, n_tokens, d)
    v = qkv[:, 2 * d:3 * d].reshape(bt, n_tokens, d)

    # Attention: f32 scores / softmax stats; MXU inputs in compute_dtype.
    sim = jnp.einsum('bid,bjd->bij',
                     q.astype(compute_dtype), k.astype(compute_dtype),
                     preferred_element_type=jnp.float32)          # (bt, n, n)
    sim = sim - jnp.max(sim, axis=-1, keepdims=True)
    p = jnp.exp(sim)
    l = jnp.sum(p, axis=-1, keepdims=True)                        # (bt, n, 1)

    out_h = jnp.einsum('bij,bjd->bid',
                       p.astype(compute_dtype), v.astype(compute_dtype),
                       preferred_element_type=jnp.float32)        # (bt, n, d)
    # Normalize on the (n, dim_head) output (fewer elements than sim when n > d),
    # using the EUP reciprocal so the divide stays off the VALU slot.
    out_h = out_h * pl.reciprocal(l, approx=True)

    # Accumulate this head's contribution to the output projection:
    #   concat_h(out_h) @ Wout == sum_h out_h @ Wout[h]
    out2 = out_h.reshape(rows, d).astype(compute_dtype)
    acc_ref[...] += jnp.dot(out2, wo_ref[hh], preferred_element_type=jnp.float32)

    @pl.when(hh == pl.num_programs(1) - 1)
    def _finish():
        o_ref[...] = acc_ref[...].astype(o_ref.dtype)


def row_col_attention(x, w_qkv, w_out, b_out, *, heads, dim_head,
                      block_b=None, compute_dtype=jnp.bfloat16):
    """x: (s, b, n, dim).  w_qkv: (dim, 3*heads*dim_head)  (to_qkv weight, transposed).
       w_out: (heads*dim_head, dim)  (to_out weight, transposed).  b_out: (dim,)."""
    s, b, n, dim = x.shape
    inner = heads * dim_head
    assert w_qkv.shape == (dim, 3 * inner)
    assert w_out.shape == (inner, dim)
    scale = float(dim_head) ** -0.5
    compute_dtype = jnp.dtype(compute_dtype)

    B = s * b

    # Tile-size selection: block_b*n must be a multiple of 8 (f32 sublane tile);
    # never fall back to "the whole batch in one tile".
    align = 8 // math.gcd(n, 8)
    if block_b is None:
        block_b = max(1, 1024 // max(1, n))        # target ~1024 token rows / step
    block_b = _ceil_to(block_b, align)
    b_padded_max = _ceil_to(B, align)
    block_b = min(block_b, b_padded_max)
    # Prefer >= 2 steps on the "parallel" axis (v7x has 2 TensorCores).
    if block_b >= b_padded_max and b_padded_max >= 2 * align:
        block_b = _ceil_to(b_padded_max // 2, align)
    num_tiles = -(-B // block_b)
    Bp = num_tiles * block_b
    rows_blk = block_b * n

    x2 = x.reshape(B * n, dim)
    if Bp != B:
        # Pad with whole fake batch elements (self-contained attention blocks);
        # they are sliced off after the call.
        x2 = jnp.pad(x2, ((0, (Bp - B) * n), (0, 0)))

    # Fused per-head projection slab [Wq_h | Wk_h | Wv_h] with the softmax scale
    # folded into Wq; pre-cast to compute_dtype (halves weight DMA bytes on bf16,
    # removes in-kernel weight casts).
    wq, wk, wv = jnp.split(w_qkv, 3, axis=1)                       # each (dim, inner)

    def per_head(w):                                               # -> (heads, dim, d)
        return w.reshape(dim, heads, dim_head).transpose(1, 0, 2)

    wqkv_h = jnp.concatenate(
        [per_head(wq * scale), per_head(wk), per_head(wv)],
        axis=-1).astype(compute_dtype)                             # (heads, dim, 3d)
    wo_h = w_out.reshape(heads, dim_head, dim).astype(compute_dtype)
    bo = b_out.reshape(1, dim).astype(jnp.float32)

    grid = (num_tiles, heads)

    # VMEM budget derived from the actual buffers (plus internal f32 scratch).
    x_item = jnp.dtype(x.dtype).itemsize
    c_item = compute_dtype.itemsize
    est = (2 * rows_blk * dim * x_item                 # x tile (double-buffered)
           + 2 * rows_blk * dim * x_item               # out tile
           + rows_blk * dim * 4                        # f32 accumulator
           + 2 * (wqkv_h.size + wo_h.size) * c_item + dim * 4
           + rows_blk * (3 * dim_head) * 4             # fused qkv slab (f32)
           + 3 * rows_blk * dim_head * (4 + c_item)    # q/k/v + casts
           + 2 * block_b * n * n * 4                   # sim + p (f32)
           + rows_blk * dim_head * 4)                  # out_h
    vmem_limit = int(min(100 * 1024 * 1024, max(32 * 1024 * 1024, 2 * est)))

    flops = (2 * Bp * n * dim * 3 * inner              # qkv projections
             + 2 * Bp * heads * n * n * dim_head * 2   # q@k^T and p@v
             + 2 * Bp * n * inner * dim)               # output projection
    bytes_accessed = (Bp * n * dim * x_item            # x read once (head-resident)
                      + (wqkv_h.size + wo_h.size) * c_item + dim * 4
                      + Bp * n * dim * x_item)         # output write

    kernel = functools.partial(rowcol_attention_kernel, n_tokens=n,
                               compute_dtype=compute_dtype)

    out2 = pl.pallas_call(
        kernel,
        out_shape=jax.ShapeDtypeStruct((Bp * n, dim), x.dtype),
        grid_spec=pltpu.PrefetchScalarGridSpec(
            num_scalar_prefetch=0,
            grid=grid,
            in_specs=[
                # x tile: fetched once per batch tile, resident across the head sweep.
                pl.BlockSpec((rows_blk, dim), lambda i, hh: (i, 0)),
                # Weights: constant index maps -> DMA'd once, VMEM-resident.
                pl.BlockSpec((heads, dim, 3 * dim_head), lambda i, hh: (0, 0, 0)),
                pl.BlockSpec((heads, dim_head, dim), lambda i, hh: (0, 0, 0)),
                pl.BlockSpec((1, dim), lambda i, hh: (0, 0)),
            ],
            out_specs=pl.BlockSpec((rows_blk, dim), lambda i, hh: (i, 0)),
            scratch_shapes=[pltpu.VMEM((rows_blk, dim), jnp.float32)],
        ),
        compiler_params=pltpu.CompilerParams(
            dimension_semantics=("parallel", "arbitrary"),
            vmem_limit_bytes=vmem_limit,
        ),
        cost_estimate=pl.CostEstimate(
            flops=int(flops),
            transcendentals=int(Bp * heads * n * (n + 1)),
            bytes_accessed=int(bytes_accessed),
        ),
    )(x2, wqkv_h, wo_h, bo)

    return out2[: B * n].reshape(s, b, n, dim)


if __name__ == "__main__":
    # Small shapes consistent with the module: RowColAttention(dim=32, heads=8, dim_head=16)
    s, b, n, dim = 2, 2, 8, 32
    heads, dim_head = 8, 16
    inner = heads * dim_head

    key = jax.random.PRNGKey(0)
    k_x, k_qkv, k_o, k_b = jax.random.split(key, 4)
    x = jax.random.normal(k_x, (s, b, n, dim), dtype=jnp.float32)
    # nn.Linear(dim, inner*3, bias=False): weight [inner*3, dim]; stored transposed.
    w_qkv = jax.random.normal(k_qkv, (dim, 3 * inner), dtype=jnp.float32) * 0.05
    # nn.Linear(inner, dim): weight [dim, inner]; stored transposed; bias [dim].
    w_out = jax.random.normal(k_o, (inner, dim), dtype=jnp.float32) * 0.05
    b_out = jax.random.normal(k_b, (dim,), dtype=jnp.float32) * 0.05

    # Pure-JAX reference mirroring the PyTorch forward (mask=None).
    qkv = x @ w_qkv
    q, k, v = jnp.split(qkv, 3, axis=-1)

    def heads_first(t):  # 's b n (h d) -> s b h n d'
        return t.reshape(s, b, n, heads, dim_head).transpose(0, 1, 3, 2, 4)

    qh, kh, vh = map(heads_first, (q, k, v))
    sim = jnp.einsum('sbhid,sbhjd->sbhij', qh, kh) * (dim_head ** -0.5)
    attn = jax.nn.softmax(sim, axis=-1)
    oh = jnp.einsum('sbhij,sbhjd->sbhid', attn, vh)
    o_cat = oh.transpose(0, 1, 3, 2, 4).reshape(s, b, n, inner)
    ref = o_cat @ w_out + b_out

    # f32 MXU-input path (strict accuracy).
    out_f32 = jax.block_until_ready(
        row_col_attention(x, w_qkv, w_out, b_out, heads=heads, dim_head=dim_head,
                          compute_dtype=jnp.float32))
    err_f32 = float(jnp.max(jnp.abs(out_f32 - ref)))
    assert jnp.allclose(out_f32, ref, atol=5e-3, rtol=5e-3), \
        f"f32 mismatch, max abs err={err_f32}"

    # Default bf16 MXU-input path (fast on v5e/v6e/v7x; f32 accumulation/softmax).
    out_bf16 = jax.block_until_ready(
        row_col_attention(x, w_qkv, w_out, b_out, heads=heads, dim_head=dim_head))
    err_bf16 = float(jnp.max(jnp.abs(out_bf16 - ref)))
    assert jnp.allclose(out_bf16, ref, atol=8e-2, rtol=8e-2), \
        f"bf16 mismatch, max abs err={err_bf16}"

    print("KERNEL_OK")
</pallas_src>

<mosaic_0001>
module attributes {stable_mosaic.version = 11 : i64} {
  func.func @rowcol_attention_kernel(%arg0: i32, %arg1: i32, %arg2: memref<16x32xf32, #tpu.memory_space<vmem>>, %arg3: memref<8x32x48xf32, #tpu.memory_space<vmem>>, %arg4: memref<8x16x32xf32, #tpu.memory_space<vmem>>, %arg5: memref<1x32xf32, #tpu.memory_space<vmem>>, %arg6: memref<16x32xf32, #tpu.memory_space<vmem>>, %arg7: memref<16x32xf32, #tpu.memory_space<vmem>>) attributes {dimension_semantics = [#tpu.dimension_semantics<parallel>, #tpu.dimension_semantics<arbitrary>], iteration_bounds = array<i64: 2, 8>, scalar_prefetch = 0 : i64, scratch_operands = 1 : i64, tpu.core_type = #tpu.core_type<tc>, window_params = [{transform_indices = @transform_0, window_bounds = array<i64: 16, 32>}, {pipeline_mode = #tpu.pipeline_mode<synchronous>, transform_indices = @transform_1, window_bounds = array<i64: 8, 32, 48>}, {pipeline_mode = #tpu.pipeline_mode<synchronous>, transform_indices = @transform_2, window_bounds = array<i64: 8, 16, 32>}, {pipeline_mode = #tpu.pipeline_mode<synchronous>, transform_indices = @transform_3, window_bounds = array<i64: 1, 32>}, {transform_indices = @transform_4, window_bounds = array<i64: 16, 32>}]} {
    %c0_i32 = arith.constant 0 : i32
    %0 = arith.cmpi eq, %arg1, %c0_i32 : i32
    %1 = arith.extui %0 : i1 to i32
    %c0_i32_0 = arith.constant 0 : i32
    %2 = arith.cmpi ne, %1, %c0_i32_0 : i32
    scf.if %2 {
      %c0_16 = arith.constant 0 : index
      %c0_17 = arith.constant 0 : index
      %37 = vector.load %arg5[%c0_16, %c0_17] : memref<1x32xf32, #tpu.memory_space<vmem>>, vector<1x32xf32>
      %38 = vector.shape_cast %37 : vector<1x32xf32> to vector<1x32xf32>
      %39 = vector.broadcast %38 : vector<1x32xf32> to vector<16x32xf32>
      %c0_18 = arith.constant 0 : index
      %c0_19 = arith.constant 0 : index
      %40 = vector.load %arg7[%c0_18, %c0_19] : memref<16x32xf32, #tpu.memory_space<vmem>>, vector<16x32xf32>
      tpu.vector_store %arg7[%c0_18, %c0_19], %39 {strides = array<i32>} : memref<16x32xf32, #tpu.memory_space<vmem>>, vector<16x32xf32>,
    } else {
    }
    %c0 = arith.constant 0 : index
    %c0_1 = arith.constant 0 : index
    %3 = vector.load %arg2[%c0, %c0_1] : memref<16x32xf32, #tpu.memory_space<vmem>>, vector<16x32xf32>
    %4 = arith.index_cast %arg1 : i32 to index
    %c0_2 = arith.constant 0 : index
    %c0_3 = arith.constant 0 : index
    %5 = vector.load %arg3[%4, %c0_2, %c0_3] : memref<8x32x48xf32, #tpu.memory_space<vmem>>, vector<1x32x48xf32>
    %6 = vector.shape_cast %5 : vector<1x32x48xf32> to vector<32x48xf32>
    %cst = arith.constant dense<0.000000e+00> : vector<16x48xf32>
    %7 = tpu.matmul %3, %6, %cst {dimension_numbers = #tpu.dot_dimension_numbers<[1], [0], [0], [1], [0, 0, 1, 1], [], []>} : vector<16x32xf32>, vector<32x48xf32>, vector<16x48xf32> -> vector<16x48xf32>
    %8 = vector.extract_strided_slice %7 {offsets = [0, 0], sizes = [16, 16], strides = [1, 1]} : vector<16x48xf32> to vector<16x16xf32>
    %9 = vector.shape_cast %8 : vector<16x16xf32> to vector<2x8x16xf32>
    %10 = vector.extract_strided_slice %7 {offsets = [0, 16], sizes = [16, 16], strides = [1, 1]} : vector<16x48xf32> to vector<16x16xf32>
    %11 = vector.shape_cast %10 : vector<16x16xf32> to vector<2x8x16xf32>
    %12 = vector.extract_strided_slice %7 {offsets = [0, 32], sizes = [16, 16], strides = [1, 1]} : vector<16x48xf32> to vector<16x16xf32>
    %13 = vector.shape_cast %12 : vector<16x16xf32> to vector<2x8x16xf32>
    "tpu.trace_start"() <{level = 10 : i32, message = "bid,bjd->bij"}> : () -> ()
    %cst_4 = arith.constant dense<0.000000e+00> : vector<2x8x8xf32>
    %14 = tpu.matmul %9, %11, %cst_4 {dimension_numbers = #tpu.dot_dimension_numbers<[2], [2], [1], [1], [0, 0, 0, 1, 1, 1], [0], [0]>} : vector<2x8x16xf32>, vector<2x8x16xf32>, vector<2x8x8xf32> -> vector<2x8x8xf32>
    "tpu.trace_stop"() : () -> ()
    %cst_5 = arith.constant dense<0xFF800000> : vector<2x8xf32>
    %15 = vector.multi_reduction <maximumf>, %14, %cst_5 [2] : vector<2x8x8xf32> to vector<2x8xf32>
    %16 = vector.shape_cast %15 : vector<2x8xf32> to vector<2x8x1xf32>
    %17 = vector.broadcast %16 : vector<2x8x1xf32> to vector<2x8x8xf32>
    %18 = arith.subf %14, %17 : vector<2x8x8xf32>
    %19 = math.exp %18 : vector<2x8x8xf32>
    %cst_6 = arith.constant dense<0.000000e+00> : vector<2x8xf32>
    %20 = vector.multi_reduction <add>, %19, %cst_6 [2] : vector<2x8x8xf32> to vector<2x8xf32>
    %21 = vector.shape_cast %20 : vector<2x8xf32> to vector<2x8x1xf32>
    "tpu.trace_start"() <{level = 10 : i32, message = "bij,bjd->bid"}> : () -> ()
    %cst_7 = arith.constant dense<0.000000e+00> : vector<2x8x16xf32>
    %22 = tpu.matmul %19, %13, %cst_7 {dimension_numbers = #tpu.dot_dimension_numbers<[2], [1], [1], [2], [0, 0, 0, 1, 1, 2], [0], [0]>} : vector<2x8x8xf32>, vector<2x8x16xf32>, vector<2x8x16xf32> -> vector<2x8x16xf32>
    "tpu.trace_stop"() : () -> ()
    %23 = tpu.reciprocal %21 {approx = true} : vector<2x8x1xf32> -> vector<2x8x1xf32>
    %24 = vector.broadcast %23 : vector<2x8x1xf32> to vector<2x8x16xf32>
    %25 = arith.mulf %22, %24 : vector<2x8x16xf32>
    %26 = vector.shape_cast %25 : vector<2x8x16xf32> to vector<16x16xf32>
    %c0_8 = arith.constant 0 : index
    %c0_9 = arith.constant 0 : index
    %27 = vector.load %arg7[%c0_8, %c0_9] : memref<16x32xf32, #tpu.memory_space<vmem>>, vector<16x32xf32>
    %28 = arith.index_cast %arg1 : i32 to index
    %c0_10 = arith.constant 0 : index
    %c0_11 = arith.constant 0 : index
    %29 = vector.load %arg4[%28, %c0_10, %c0_11] : memref<8x16x32xf32, #tpu.memory_space<vmem>>, vector<1x16x32xf32>
    %30 = vector.shape_cast %29 : vector<1x16x32xf32> to vector<16x32xf32>
    %cst_12 = arith.constant dense<0.000000e+00> : vector<16x32xf32>
    %31 = tpu.matmul %26, %30, %cst_12 {dimension_numbers = #tpu.dot_dimension_numbers<[1], [0], [0], [1], [0, 0, 1, 1], [], []>} : vector<16x16xf32>, vector<16x32xf32>, vector<16x32xf32> -> vector<16x32xf32>
    %32 = arith.addf %27, %31 : vector<16x32xf32>
    %c0_13 = arith.constant 0 : index
    %c0_14 = arith.constant 0 : index
    %33 = vector.load %arg7[%c0_13, %c0_14] : memref<16x32xf32, #tpu.memory_space<vmem>>, vector<16x32xf32>
    tpu.vector_store %arg7[%c0_13, %c0_14], %32 {strides = array<i32>} : memref<16x32xf32, #tpu.memory_space<vmem>>, vector<16x32xf32>,
    %c7_i32 = arith.constant 7 : i32
    %34 = arith.cmpi eq, %arg1, %c7_i32 : i32
    %35 = arith.extui %34 : i1 to i32
    %c0_i32_15 = arith.constant 0 : i32
    %36 = arith.cmpi ne, %35, %c0_i32_15 : i32
    scf.if %36 {
      %c0_16 = arith.constant 0 : index
      %c0_17 = arith.constant 0 : index
      %37 = vector.load %arg7[%c0_16, %c0_17] : memref<16x32xf32, #tpu.memory_space<vmem>>, vector<16x32xf32>
      %c0_18 = arith.constant 0 : index
      %c0_19 = arith.constant 0 : index
      %38 = vector.load %arg6[%c0_18, %c0_19] : memref<16x32xf32, #tpu.memory_space<vmem>>, vector<16x32xf32>
      tpu.vector_store %arg6[%c0_18, %c0_19], %37 {strides = array<i32>} : memref<16x32xf32, #tpu.memory_space<vmem>>, vector<16x32xf32>,
    } else {
    }
    return
  }
  func.func @transform_0(%arg0: i32, %arg1: i32) -> (i32, i32) {
    %c0_i32 = arith.constant 0 : i32
    %c0_i32_0 = arith.constant 0 : i32
    return %arg0, %c0_i32 : i32, i32
  }
  func.func @transform_1(%arg0: i32, %arg1: i32) -> (i32, i32, i32) {
    %c0_i32 = arith.constant 0 : i32
    %c0_i32_0 = arith.constant 0 : i32
    %c0_i32_1 = arith.constant 0 : i32
    %c0_i32_2 = arith.constant 0 : i32
    return %c0_i32, %c0_i32_0, %c0_i32_1 : i32, i32, i32
  }
  func.func @transform_2(%arg0: i32, %arg1: i32) -> (i32, i32, i32) {
    %c0_i32 = arith.constant 0 : i32
    %c0_i32_0 = arith.constant 0 : i32
    %c0_i32_1 = arith.constant 0 : i32
    %c0_i32_2 = arith.constant 0 : i32
    return %c0_i32, %c0_i32_0, %c0_i32_1 : i32, i32, i32
  }
  func.func @transform_3(%arg0: i32, %arg1: i32) -> (i32, i32) {
    %c0_i32 = arith.constant 0 : i32
    %c0_i32_0 = arith.constant 0 : i32
    %c0_i32_1 = arith.constant 0 : i32
    return %c0_i32, %c0_i32_0 : i32, i32
  }
  func.func @transform_4(%arg0: i32, %arg1: i32) -> (i32, i32) {
    %c0_i32 = arith.constant 0 : i32
    %c0_i32_0 = arith.constant 0 : i32
    return %arg0, %c0_i32 : i32, i32
  }
}

</mosaic_0001>

<llo_original>
// kernel: tpu_custom_call.1
$region0: #{tpu_custom_call.1}
  #allocation0 [shape = 'u32[]', space=smem, size = 0x4, offset = 0x4, fixed_abs, tag = 'smem constant byte address 0x4 - core index']
  #allocation1 [shape = 'u32[144,128]{1,0:T(1,128)}', space=vmem, size = 0x12000, scoped, tag = 'internal scratch']
  #allocation2 [shape = 'f32[16,32]{1,0:T(8,128)}', space=vmem, size = 0x2000, scoped, tag = 'scratch operand']
  %s0 = inlined_call_operand.hbm [shape: f32[32,32], index: 0, kind: input, shape index: {}]
  %s1 = inlined_call_operand.hbm [shape: f32[8,32,48], index: 1, kind: input, shape index: {}]
  %s2 = inlined_call_operand.hbm [shape: f32[8,16,32], index: 2, kind: input, shape index: {}]
  %s3 = inlined_call_operand.vmem [shape: f32[1,32], index: 3, kind: input, shape index: {}]
  %s4 = inlined_call_operand.hbm [shape: f32[32,32], index: 4, kind: output, shape index: {}]
  %s5 = sld [smem:[#allocation0]]
  $region69: #{tpu_custom_call.1} parent=0
    _
  %s7 = ssub.s32 1, %s5
  %s8 = scalar_select 0, %s7, %s5
  $region1: #{tpu_custom_call.1} parent=0
    #allocation3 [shape = 'u8[16384]{0}', space=vmem, size = 0x4000, scoped, tag = 'input window, operand 0']
    #allocation4 [shape = 's32[2]{0}', space=sflag, size = 0x8, scoped, tag = 'scoped memory for tpu_custom_call.1']
    #allocation5 [shape = 's32[2]{0}', space=sflag, size = 0x8, scoped, tag = 'scoped memory for tpu_custom_call.1']
    #allocation6 [shape = 'u8[131072]{0}', space=vmem, size = 0x20000, scoped, tag = 'input window, operand 1, single buffered']
    #allocation7 [shape = 's32[1]{0}', space=sflag, size = 0x4, scoped, tag = 'scoped memory for tpu_custom_call.1']
    #allocation8 [shape = 'u8[65536]{0}', space=vmem, size = 0x10000, scoped, tag = 'input window, operand 2, single buffered']
    #allocation9 [shape = 'u8[16384]{0}', space=vmem, size = 0x4000, scoped, tag = 'output window, operand 0']
    %9 = vsyncpa [#allocation4], 0
    %s10 = scalar_lea.sflag [#allocation4], 1
    %11 = vsyncpa %s10, 0
    %12 = vsyncpa [#allocation7], 0
    %13 = vsyncpa [#allocation5], 0
    %s14 = scalar_lea.sflag [#allocation5], 1
    %15 = vsyncpa %s14, 0
    loop: start=0, step=1, limit=18
    $region2: #{tpu_custom_call.1} parent=1 // loop_pre_header
      _
    $region3: #{tpu_custom_call.1} parent=1 // loop_header
      %s17 = sphi 0, %s21
      %p18 = scmp.ge.s32.totalorder %s17, 18
      %s24 = sphi 0, %s36
      %s25 = sphi 0, %s32
      %s26 = sphi 0, %s24
      %s27 = sphi 0, %s25
      %s28 = sphi 0, %s26
      %s29 = sphi 0, %s27
      %s39 = sphi 0, %s41
      %s42 = sphi 0, %s39
      %s43 = sphi 0, %s42
      %s59 = sphi 0, %s43
      %s63 = sphi 0, %s63
      %s65 = sphi 0, %s63
      %s66 = sphi 0, %s65
      %s80 = sphi 0, %s66
      %s84 = sphi 0, %s84
      %s86 = sphi 0, %s84
      %s87 = sphi 0, %s86
      %s101 = sphi 0, %s87
      %s105 = sphi 0, %s105
      %s107 = sphi 0, %s105
      %s108 = sphi 0, %s107
      %s122 = sphi 0, %s108
      %s128 = sphi 0, %s130
      %s131 = sphi 0, %s128
      %s132 = sphi 0, %s131
      %s148 = sphi 0, %s132
    $region4: #{tpu_custom_call.1} parent=1 // loop_header_branch
      %20 = sbr.rel (%p18) target = $region8
    $region5: #{tpu_custom_call.1} parent=1 // loop_body
      %s22 = ssub.s32 %s17, 1
      %s23 = ssub.s32 %s17, 2
      %s30 = sadd.s32 1, %s25
      %p31 = scmp.ge.s32.totalorder %s30, 8
      %s32 = scalar_select %p31, 0, %s30
      %s33 = sadd.s32 1, %s24
      %s34 = scalar_select %p31, %s33, %s24
      %p35 = scmp.ge.s32.totalorder %s34, 2
      %s36 = scalar_select %p35, 0, %s34
      %s37 = ssub.s32 %s24, %s36
      %p38 = scmp.eq.s32.totalorder %s37, 0
      %s40 = sadd.s32 %s39, 1
      %s41 = scalar_select %p38, %s39, %s40
      %p44 = pneg %p38
      %p45 = scmp.eq.s32.totalorder %s17, 15
      %p46 = por %p44, %p45
      %p47 = scmp.ne.s32.totalorder %s39, %s42
      %p48 = scmp.eq.s32.totalorder %s17, 0
      %p49 = por %p47, %p48
      %p50 = scmp.ne.s32.totalorder %s39, %s42
      %p51 = scmp.eq.s32.totalorder %s22, 15
      %p52 = por %p50, %p51
      %p53 = scmp.ne.s32.totalorder %s42, %s43
      %p54 = scmp.eq.s32.totalorder %s22, 0
      %p55 = por %p53, %p54
      %p56 = scmp.ne.s32.totalorder %s42, %s43
      %p57 = scmp.eq.s32.totalorder %s23, 15
      %p58 = por %p56, %p57
      %p60 = scmp.ne.s32.totalorder %s43, %s59
      %p61 = scmp.eq.s32.totalorder %s23, 0
      %p62 = por %p60, %p61
      %s64 = sadd.s32 %s63, 1
      %p67 = scmp.eq.s32.totalorder %s17, 15
      %p68 = scmp.ne.s32.totalorder %s63, %s65
      %p69 = scmp.eq.s32.totalorder %s17, 0
      %p70 = por %p68, %p69
      %p71 = scmp.ne.s32.totalorder %s63, %s65
      %p72 = scmp.eq.s32.totalorder %s22, 15
      %p73 = por %p71, %p72
      %p74 = scmp.ne.s32.totalorder %s65, %s66
      %p75 = scmp.eq.s32.totalorder %s22, 0
      %p76 = por %p74, %p75
      %p77 = scmp.ne.s32.totalorder %s65, %s66
      %p78 = scmp.eq.s32.totalorder %s23, 15
      %p79 = por %p77, %p78
      %p81 = scmp.ne.s32.totalorder %s66, %s80
      %p82 = scmp.eq.s32.totalorder %s23, 0
      %p83 = por %p81, %p82
      %s85 = sadd.s32 %s84, 1
      %p88 = scmp.eq.s32.totalorder %s17, 15
      %p89 = scmp.ne.s32.totalorder %s84, %s86
      %p90 = scmp.eq.s32.totalorder %s17, 0
      %p91 = por %p89, %p90
      %p92 = scmp.ne.s32.totalorder %s84, %s86
      %p93 = scmp.eq.s32.totalorder %s22, 15
      %p94 = por %p92, %p93
      %p95 = scmp.ne.s32.totalorder %s86, %s87
      %p96 = scmp.eq.s32.totalorder %s22, 0
      %p97 = por %p95, %p96
      %p98 = scmp.ne.s32.totalorder %s86, %s87
      %p99 = scmp.eq.s32.totalorder %s23, 15
      %p100 = por %p98, %p99
      %p102 = scmp.ne.s32.totalorder %s87, %s101
      %p103 = scmp.eq.s32.totalorder %s23, 0
      %p104 = por %p102, %p103
      %s106 = sadd.s32 %s105, 1
      %p109 = scmp.eq.s32.totalorder %s17, 15
      %p110 = scmp.ne.s32.totalorder %s105, %s107
      %p111 = scmp.eq.s32.totalorder %s17, 0
      %p112 = por %p110, %p111
      %p113 = scmp.ne.s32.totalorder %s105, %s107
      %p114 = scmp.eq.s32.totalorder %s22, 15
      %p115 = por %p113, %p114
      %p116 = scmp.ne.s32.totalorder %s107, %s108
      %p117 = scmp.eq.s32.totalorder %s22, 0
      %p118 = por %p116, %p117
      %p119 = scmp.ne.s32.totalorder %s107, %s108
      %p120 = scmp.eq.s32.totalorder %s23, 15
      %p121 = por %p119, %p120
      %p123 = scmp.ne.s32.totalorder %s108, %s122
      %p124 = scmp.eq.s32.totalorder %s23, 0
      %p125 = por %p123, %p124
      %s126 = ssub.s32 %s24, %s36
      %p127 = scmp.eq.s32.totalorder %s126, 0
      %s129 = sadd.s32 %s128, 1
      %s130 = scalar_select %p127, %s128, %s129
      %p133 = pneg %p127
      %p134 = scmp.eq.s32.totalorder %s17, 15
      %p135 = por %p133, %p134
      %p136 = scmp.ne.s32.totalorder %s128, %s131
      %p137 = scmp.eq.s32.totalorder %s17, 0
      %p138 = por %p136, %p137
      %p139 = scmp.ne.s32.totalorder %s128, %s131
      %p140 = scmp.eq.s32.totalorder %s22, 15
      %p141 = por %p139, %p140
      %p142 = scmp.ne.s32.totalorder %s131, %s132
      %p143 = scmp.eq.s32.totalorder %s22, 0
      %p144 = por %p142, %p143
      %p145 = scmp.ne.s32.totalorder %s131, %s132
      %p146 = scmp.eq.s32.totalorder %s23, 15
      %p147 = por %p145, %p146
      %p149 = scmp.ne.s32.totalorder %s132, %s148
      %p150 = scmp.eq.s32.totalorder %s23, 0
      %p151 = por %p149, %p150
      %p152 = scmp.le.s32.totalorder 1, %s17
      %p153 = scmp.lt.s32.totalorder %s17, 17
      %p154 = pnand %p152, %p153
      %p155 = pneg %p154
      // Predicated region
      $region9: #{tpu_custom_call.1} parent=5 // pred_check
        _
      $region10: #{tpu_custom_call.1} parent=5 // pred_check_branch
        %157 = sbr.rel (%p154) target = $region12
      $region11: #{tpu_custom_call.1} parent=5 // pred_region
        %s158 = ssub.s32 %s17, 1
        // Predicated region
        $region13: #{tpu_custom_call.1} parent=11 // pred_check
          %p159 = pneg %p76
        $region14: #{tpu_custom_call.1} parent=11 // pred_check_branch
          %161 = sbr.rel (%p159) target = $region16
        $region15: #{tpu_custom_call.1} parent=11 // pred_region
          %s163 = ssub.s32 4096, 4096
          %164 = vsyncadd [#allocation7], %s163
          %s165 = sshll.u32 [#allocation6], 4
          %s166 = int_to_ptr.vmem [resolvable:$true] %s165
          %171 = dma.hbm_to_vmem [thread:$0]  %s1, 4096, %s166, [#allocation7], 128, 128, 8
        $region16: #{tpu_custom_call.1} parent=11 // pred_fallthru
          _
        // Predicated region
        $region17: #{tpu_custom_call.1} parent=11 // pred_check
          %p172 = pneg %p97
        $region18: #{tpu_custom_call.1} parent=11 // pred_check_branch
          %174 = sbr.rel (%p172) target = $region20
        $region19: #{tpu_custom_call.1} parent=11 // pred_region
          %s176 = ssub.s32 2048, 2048
          %177 = vsyncadd [#allocation7], %s176
          %s178 = sshll.u32 [#allocation8], 4
          %s179 = int_to_ptr.vmem [resolvable:$true] %s178
          %184 = dma.hbm_to_vmem [thread:$0]  %s2, 2048, %s179, [#allocation7], 128, 128, 8
        $region20: #{tpu_custom_call.1} parent=11 // pred_fallthru
          _
        // Predicated region
        $region21: #{tpu_custom_call.1} parent=11 // pred_check
          %p185 = pneg %p118
        $region22: #{tpu_custom_call.1} parent=11 // pred_check_branch
          %187 = sbr.rel (%p185) target = $region24
        $region23: #{tpu_custom_call.1} parent=11 // pred_region
          _
        $region24: #{tpu_custom_call.1} parent=11 // pred_fallthru
          _
      $region12: #{tpu_custom_call.1} parent=5 // pred_fallthru
        _
      %p188 = scmp.lt.s32.totalorder %s17, 16
      // Predicated region
      $region25: #{tpu_custom_call.1} parent=5 // pred_check
        %p189 = pneg %p188
      $region26: #{tpu_custom_call.1} parent=5 // pred_check_branch
        %191 = sbr.rel (%p189) target = $region28
      $region27: #{tpu_custom_call.1} parent=5 // pred_region
        // Predicated region
        $region29: #{tpu_custom_call.1} parent=27 // pred_check
          %p192 = pneg %p49
        $region30: #{tpu_custom_call.1} parent=27 // pred_check_branch
          %194 = sbr.rel (%p192) target = $region32
        $region31: #{tpu_custom_call.1} parent=27 // pred_region
          %s195 = sand.u32 %s39, 1
          %s196 = scalar_lea.sflag [#allocation4], %s195
          %s197 = sand.u32 %s39, 1
          %s198 = smul.addr %s197, 16
          %s199 = scalar_lea.vmem [#allocation3], %s198
          %s200 = smul.u32 2, %s24
          %s202 = ssub.s32 256, 256
          %203 = vsyncadd %s196, %s202
          %s204 = smul.addr %s200, 128
          %s205 = scalar_lea.hbm %s0, %s204
          %s206 = sshll.u32 %s199, 4
          %s207 = int_to_ptr.vmem [resolvable:$true] %s206
          %212 = dma.hbm_to_vmem [thread:$0]  %s205, 256, %s207, %s196, 128, 128, 8
        $region32: #{tpu_custom_call.1} parent=27 // pred_fallthru
          _
      $region28: #{tpu_custom_call.1} parent=5 // pred_fallthru
        _
      %p213 = scmp.le.s32.totalorder 1, %s17
      %p214 = scmp.lt.s32.totalorder %s17, 17
      %p215 = pnand %p213, %p214
      %p216 = pneg %p215
      // Predicated region
      $region33: #{tpu_custom_call.1} parent=5 // pred_check
        _
      $region34: #{tpu_custom_call.1} parent=5 // pred_check_branch
        %218 = sbr.rel (%p215) target = $region36
      $region35: #{tpu_custom_call.1} parent=5 // pred_region
        %s219 = ssub.s32 %s17, 1
        %s220 = sand.u32 %s42, 1
        %s221 = scalar_lea.sflag [#allocation4], %s220
        %s222 = sand.u32 %s42, 1
        %s223 = smul.addr %s222, 16
        %s224 = scalar_lea.vmem [#allocation3], %s223
        // Predicated region
        $region37: #{tpu_custom_call.1} parent=35 // pred_check
          %p225 = pneg %p55
        $region38: #{tpu_custom_call.1} parent=35 // pred_check_branch
          %227 = sbr.rel (%p225) target = $region40
        $region39: #{tpu_custom_call.1} parent=35 // pred_region
          %228 = dma.done %s221, 256
        $region40: #{tpu_custom_call.1} parent=35 // pred_fallthru
          _
        // Predicated region
        $region41: #{tpu_custom_call.1} parent=35 // pred_check
          %p229 = pneg %p76
        $region42: #{tpu_custom_call.1} parent=35 // pred_check_branch
          %231 = sbr.rel (%p229) target = $region44
        $region43: #{tpu_custom_call.1} parent=35 // pred_region
          %232 = dma.done [#allocation7], 4096
        $region44: #{tpu_custom_call.1} parent=35 // pred_fallthru
          _
        // Predicated region
        $region45: #{tpu_custom_call.1} parent=35 // pred_check
          %p233 = pneg %p97
        $region46: #{tpu_custom_call.1} parent=35 // pred_check_branch
          %235 = sbr.rel (%p233) target = $region48
        $region47: #{tpu_custom_call.1} parent=35 // pred_region
          %236 = dma.done [#allocation7], 2048
        $region48: #{tpu_custom_call.1} parent=35 // pred_fallthru
          _
        %s237 = sand.u32 %s42, 1
        %s238 = scalar_lea.sflag [#allocation4], %s237
        %s239 = sand.u32 %s42, 1
        %s240 = smul.addr %s239, 16
        %s241 = scalar_lea.vmem [#allocation3], %s240
        %p242 = pneg %p55
        %p243 = pneg %p52
        %p244 = pneg %p76
        %p245 = pneg %p73
        %p246 = pneg %p97
        %p247 = pneg %p94
        %p248 = pneg %p118
        %p249 = pneg %p115
        %p250 = pneg %p144
        %p251 = pneg %p141
        %s252 = sand.u32 %s131, 1
        %s253 = scalar_lea.sflag [#allocation5], %s252
        %s254 = sand.u32 %s131, 1
        %s255 = smul.addr %s254, 16
        %s256 = scalar_lea.vmem [#allocation9], %s255
        %s257 = smul.u32 2, %s26
        %s258 = smul.u32 2, %s26
        %p259 = scmp.eq.s32.totalorder %s27, 0
        // Predicated region
        $region49: #{tpu_custom_call.1} parent=35 // pred_check
          %p260 = pneg %p259
        $region50: #{tpu_custom_call.1} parent=35 // pred_check_branch
          %262 = sbr.rel (%p260) target = $region52
        $region51: #{tpu_custom_call.1} parent=35 // pred_region
          %v263 = vld [vmem:[%s3] sm:$0x1]
          %v265 = vlaneseq
          %v266 = vshrl.u32 %v265, 7
          %v267 = vsub.s32 0, %v266
          %v268 = vrot.slane %v263, %v267
          %vm270 = vcmask 261120
          %271 = vst.msk [vmem:[#allocation2] sm:$0xff] %vm270, %v268
          %272 = vst.msk [vmem:[#allocation2 + $0x8] sm:$0xff] %vm270, %v268
        $region52: #{tpu_custom_call.1} parent=35 // pred_fallthru
          _
        %v273 = vld [vmem:[%s224] sm:$0xff]
        %v274 = vld [vmem:[%s224 + $0x8] sm:$0xff]
        %s275 = smul.u32 %s27, 32
        %s276 = scalar_lea.vmem [#allocation6], %s275
        %v277 = vld [vmem:[%s276] sm:$0xff]
        %v278 = vld [vmem:[%s276 + $0x8] sm:$0xff]
        %v279 = vld [vmem:[%s276 + $0x10] sm:$0xff]
        %v280 = vld [vmem:[%s276 + $0x18] sm:$0xff]
        %vm281 = vcmask 261120
        %v283 = vsel %vm281, %v273, 0
        %v286 = vsel %vm281, %v274, 0
        %288 = vmatprep.subr.mxu0 0.0
        %289 = vmatpush1.msra.mxu0 %v277
        %290 = vmatprep.subr.mxu0 0.0
        %291 = vmatpush1.msra.mxu0 %v278
        %292 = vmatprep.subr.mxu0 0.0
        %293 = vmatpush1.msra.mxu0 %v279
        %294 = vmatprep.subr.mxu0 0.0
        %295 = vmatpush1.msra.mxu0 %v280
        %296 = vmatprep.subr.mxu0 0.0
        %297 = vmatpush1.msra.mxu0 0.0
        %298 = vmatprep.subr.mxu0 0.0
        %299 = vmatpush1.msra.mxu0 0.0
        %300 = vmatprep.subr.mxu0 0.0
        %301 = vmatpush1.msra.mxu0 0.0
        %302 = vmatprep.subr.mxu0 0.0
        %303 = vmatpush1.msra.mxu0 0.0
        %304 = vmatprep.subr.mxu0 0.0
        %305 = vmatpush1.msra.mxu0 0.0
        %306 = vmatprep.subr.mxu0 0.0
        %307 = vmatpush1.msra.mxu0 0.0
        %308 = vmatprep.subr.mxu0 0.0
        %309 = vmatpush1.msra.mxu0 0.0
        %310 = vmatprep.subr.mxu0 0.0
        %311 = vmatpush1.msra.mxu0 0.0
        %312 = vmatprep.subr.mxu0 0.0
        %313 = vmatpush1.msra.mxu0 0.0
        %314 = vmatprep.subr.mxu0 0.0
        %315 = vmatpush1.msra.mxu0 0.0
        %316 = vmatprep.subr.mxu0 0.0
        %317 = vmatpush1.msra.mxu0 0.0
        %318 = vmatprep.subr.mxu0 0.0
        %319 = vmatpush1.msra.mxu0 0.0
        %320 = vmatprep.subr.mxu0 0.0
        %321 = vmatpush1.msra.mxu0 0.0
        %322 = vmatprep.subr.mxu0 0.0
        %323 = vmatpush1.msra.mxu0 0.0
        %324 = vmatprep.subr.mxu0 0.0
        %325 = vmatpush1.msra.mxu0 0.0
        %326 = vmatprep.subr.mxu0 0.0
        %327 = vmatpush1.msra.mxu0 0.0
        %328 = vmatprep.subr.mxu0 0.0
        %329 = vmatpush1.msra.mxu0 0.0
        %330 = vmatprep.subr.mxu0 0.0
        %331 = vmatpush1.msra.mxu0 0.0
        %332 = vmatprep.subr.mxu0 0.0
        %333 = vmatpush1.msra.mxu0 0.0
        %334 = vmatprep.subr.mxu0 0.0
        %335 = vmatpush1.msra.mxu0 0.0
        %336 = vmatprep.subr.mxu0 0.0
        %337 = vmatpush1.msra.mxu0 0.0
        %338 = vmatprep.subr.mxu0 0.0
        %339 = vmatpush1.msra.mxu0 0.0
        %340 = vmatprep.subr.mxu0 0.0
        %341 = vmatpush1.msra.mxu0 0.0
        %342 = vmatprep.subr.mxu0 0.0
        %343 = vmatpush1.msra.mxu0 0.0
        %344 = vmatprep.subr.mxu0 0.0
        %345 = vmatpush1.msra.mxu0 0.0
        %346 = vmatprep.subr.mxu0 0.0
        %347 = vmatpush1.msra.mxu0 0.0
        %348 = vmatprep.subr.mxu0 0.0
        %349 = vmatpush1.msra.mxu0 0.0
        %350 = vmatprep.subr.mxu0 0.0
        %351 = vmatpush1.msra.mxu0 0.0
        %352 = vmatprep.mubr.f32.mxu0 0.0
        %353 = vmatmul.mubr.f32.gmra.mrb[0].mxu0 %v283
        %v354 = vpop.f32.mrb[0].mxu0
        %v355 = vadd.f32 0.0, %v354
        %v356 = vpop.f32.mrb[0].mxu0
        %357 = vmatprep.mubr.f32.mxu0 0.0
        %358 = vmatmul.mubr.f32.gmra.mrb[0].mxu0 %v286
        %v359 = vpop.f32.mrb[0].mxu0
        %v360 = vadd.f32 0.0, %v359
        %v361 = vpop.f32.mrb[0].mxu0
        %362 = vdwg.mxu0
        %364 = vrot.lane.b32.xlu0 %v355, 112
        %v365 = vpop.permute.xlu0 %364
        %vm366 = vcmask 130048
        %v367 = vsel %vm366, %v355, 0
        %v369 = vsel %vm366, %v365, 0
        %371 = vmatprep.subr.mxu0 0.0
        %372 = vmatpush1.xpose.msra.mxu0 %v369
        %373 = vmatprep.subr.mxu0 0.0
        %374 = vmatpush1.xpose.msra.mxu0 0.0
        %375 = vmatprep.subr.mxu0 0.0
        %376 = vmatpush1.xpose.msra.mxu0 0.0
        %377 = vmatprep.subr.mxu0 0.0
        %378 = vmatpush1.xpose.msra.mxu0 0.0
        %379 = vmatprep.subr.mxu0 0.0
        %380 = vmatpush1.xpose.msra.mxu0 0.0
        %381 = vmatprep.subr.mxu0 0.0
        %382 = vmatpush1.xpose.msra.mxu0 0.0
        %383 = vmatprep.subr.mxu0 0.0
        %384 = vmatpush1.xpose.msra.mxu0 0.0
        %385 = vmatprep.subr.mxu0 0.0
        %386 = vmatpush1.xpose.msra.mxu0 0.0
        %387 = vmatprep.subr.mxu0 0.0
        %388 = vmatpush1.xpose.msra.mxu0 0.0
        %389 = vmatprep.subr.mxu0 0.0
        %390 = vmatpush1.xpose.msra.mxu0 0.0
        %391 = vmatprep.subr.mxu0 0.0
        %392 = vmatpush1.xpose.msra.mxu0 0.0
        %393 = vmatprep.subr.mxu0 0.0
        %394 = vmatpush1.xpose.msra.mxu0 0.0
        %395 = vmatprep.subr.mxu0 0.0
        %396 = vmatpush1.xpose.msra.mxu0 0.0
        %397 = vmatprep.subr.mxu0 0.0
        %398 = vmatpush1.xpose.msra.mxu0 0.0
        %399 = vmatprep.subr.mxu0 0.0
        %400 = vmatpush1.xpose.msra.mxu0 0.0
        %401 = vmatprep.subr.mxu0 0.0
        %402 = vmatpush1.xpose.msra.mxu0 0.0
        %403 = vmatprep.subr.mxu0 0.0
        %404 = vmatpush1.xpose.msra.mxu0 0.0
        %405 = vmatprep.subr.mxu0 0.0
        %406 = vmatpush1.xpose.msra.mxu0 0.0
        %407 = vmatprep.subr.mxu0 0.0
        %408 = vmatpush1.xpose.msra.mxu0 0.0
        %409 = vmatprep.subr.mxu0 0.0
        %410 = vmatpush1.xpose.msra.mxu0 0.0
        %411 = vmatprep.subr.mxu0 0.0
        %412 = vmatpush1.xpose.msra.mxu0 0.0
        %413 = vmatprep.subr.mxu0 0.0
        %414 = vmatpush1.xpose.msra.mxu0 0.0
        %415 = vmatprep.subr.mxu0 0.0
        %416 = vmatpush1.xpose.msra.mxu0 0.0
        %417 = vmatprep.subr.mxu0 0.0
        %418 = vmatpush1.xpose.msra.mxu0 0.0
        %419 = vmatprep.subr.mxu0 0.0
        %420 = vmatpush1.xpose.msra.mxu0 0.0
        %421 = vmatprep.subr.mxu0 0.0
        %422 = vmatpush1.xpose.msra.mxu0 0.0
        %423 = vmatprep.subr.mxu0 0.0
        %424 = vmatpush1.xpose.msra.mxu0 0.0
        %425 = vmatprep.subr.mxu0 0.0
        %426 = vmatpush1.xpose.msra.mxu0 0.0
        %427 = vmatprep.subr.mxu0 0.0
        %428 = vmatpush1.xpose.msra.mxu0 0.0
        %429 = vmatprep.subr.mxu0 0.0
        %430 = vmatpush1.xpose.msra.mxu0 0.0
        %431 = vmatprep.subr.mxu0 0.0
        %432 = vmatpush1.xpose.msra.mxu0 0.0
        %433 = vmatprep.subr.mxu0 0.0
        %434 = vmatpush1.xpose.msra.mxu0 0.0
        %435 = vmatprep.mubr.f32.mxu0 0.0
        %436 = vmatmul.mubr.f32.gmra.mrb[0].mxu0 %v367
        %v437 = vpop.f32.mrb[0].mxu0
        %v438 = vadd.f32 0.0, %v437
        %v439 = vpop.f32.mrb[0].mxu0
        %440 = vdwg.mxu0
        %442 = vrot.lane.b32.xlu0 %v360, 112
        %v443 = vpop.permute.xlu0 %442
        %v444 = vsel %vm366, %v360, 0
        %v446 = vsel %vm366, %v443, 0
        %448 = vmatprep.subr.mxu0 0.0
        %449 = vmatpush1.xpose.msra.mxu0 %v446
        %450 = vmatprep.subr.mxu0 0.0
        %451 = vmatpush1.xpose.msra.mxu0 0.0
        %452 = vmatprep.subr.mxu0 0.0
        %453 = vmatpush1.xpose.msra.mxu0 0.0
        %454 = vmatprep.subr.mxu0 0.0
        %455 = vmatpush1.xpose.msra.mxu0 0.0
        %456 = vmatprep.subr.mxu0 0.0
        %457 = vmatpush1.xpose.msra.mxu0 0.0
        %458 = vmatprep.subr.mxu0 0.0
        %459 = vmatpush1.xpose.msra.mxu0 0.0
        %460 = vmatprep.subr.mxu0 0.0
        %461 = vmatpush1.xpose.msra.mxu0 0.0
        %462 = vmatprep.subr.mxu0 0.0
        %463 = vmatpush1.xpose.msra.mxu0 0.0
        %464 = vmatprep.subr.mxu0 0.0
        %465 = vmatpush1.xpose.msra.mxu0 0.0
        %466 = vmatprep.subr.mxu0 0.0
        %467 = vmatpush1.xpose.msra.mxu0 0.0
        %468 = vmatprep.subr.mxu0 0.0
        %469 = vmatpush1.xpose.msra.mxu0 0.0
        %470 = vmatprep.subr.mxu0 0.0
        %471 = vmatpush1.xpose.msra.mxu0 0.0
        %472 = vmatprep.subr.mxu0 0.0
        %473 = vmatpush1.xpose.msra.mxu0 0.0
        %474 = vmatprep.subr.mxu0 0.0
        %475 = vmatpush1.xpose.msra.mxu0 0.0
        %476 = vmatprep.subr.mxu0 0.0
        %477 = vmatpush1.xpose.msra.mxu0 0.0
        %478 = vmatprep.subr.mxu0 0.0
        %479 = vmatpush1.xpose.msra.mxu0 0.0
        %480 = vmatprep.subr.mxu0 0.0
        %481 = vmatpush1.xpose.msra.mxu0 0.0
        %482 = vmatprep.subr.mxu0 0.0
        %483 = vmatpush1.xpose.msra.mxu0 0.0
        %484 = vmatprep.subr.mxu0 0.0
        %485 = vmatpush1.xpose.msra.mxu0 0.0
        %486 = vmatprep.subr.mxu0 0.0
        %487 = vmatpush1.xpose.msra.mxu0 0.0
        %488 = vmatprep.subr.mxu0 0.0
        %489 = vmatpush1.xpose.msra.mxu0 0.0
        %490 = vmatprep.subr.mxu0 0.0
        %491 = vmatpush1.xpose.msra.mxu0 0.0
        %492 = vmatprep.subr.mxu0 0.0
        %493 = vmatpush1.xpose.msra.mxu0 0.0
        %494 = vmatprep.subr.mxu0 0.0
        %495 = vmatpush1.xpose.msra.mxu0 0.0
        %496 = vmatprep.subr.mxu0 0.0
        %497 = vmatpush1.xpose.msra.mxu0 0.0
        %498 = vmatprep.subr.mxu0 0.0
        %499 = vmatpush1.xpose.msra.mxu0 0.0
        %500 = vmatprep.subr.mxu0 0.0
        %501 = vmatpush1.xpose.msra.mxu0 0.0
        %502 = vmatprep.subr.mxu0 0.0
        %503 = vmatpush1.xpose.msra.mxu0 0.0
        %504 = vmatprep.subr.mxu0 0.0
        %505 = vmatpush1.xpose.msra.mxu0 0.0
        %506 = vmatprep.subr.mxu0 0.0
        %507 = vmatpush1.xpose.msra.mxu0 0.0
        %508 = vmatprep.subr.mxu0 0.0
        %509 = vmatpush1.xpose.msra.mxu0 0.0
        %510 = vmatprep.subr.mxu0 0.0
        %511 = vmatpush1.xpose.msra.mxu0 0.0
        %512 = vmatprep.mubr.f32.mxu0 0.0
        %513 = vmatmul.mubr.f32.gmra.mrb[0].mxu0 %v444
        %v514 = vpop.f32.mrb[0].mxu0
        %v515 = vadd.f32 0.0, %v514
        %v516 = vpop.f32.mrb[0].mxu0
        %517 = vdwg.mxu0
        %vm518 = vcmask 64512
        %v519 = vsel %vm518, %v438, -inf
        %520 = vmax.xlane.f32.xlu0 %v519
        %v521 = vpop.xlane.xlu0 %520
        %v522 = vsel %vm518, %v515, -inf
        %523 = vmax.xlane.f32.xlu0 %v522
        %v524 = vpop.xlane.xlu0 %523
        %v525 = vsub.f32 %v438, %v521
        %v526 = vsub.f32 %v515, %v524
        %v527 = vmul.f32 %v525, 1.442695
        %v528 = vpow.pop %v527
        %v529 = vmul.f32 %v526, 1.442695
        %v530 = vpow.pop %v529
        %v531 = vsel %vm518, %v528, 0.0
        %532 = vadd.xlane.f32.xlu0 %v531
        %v533 = vpop.xlane.xlu0 %532
        %v534 = vsel %vm518, %v530, 0.0
        %535 = vadd.xlane.f32.xlu0 %v534
        %v536 = vpop.xlane.xlu0 %535
        %537 = vrot.lane.b32.xlu0 %v355, 96
        %v538 = vpop.permute.xlu0 %537
        %v541 = vsel %vm518, %v528, 0
        %543 = vmatprep.subr.mxu0 0.0
        %544 = vmatpush1.msra.mxu0 %v538
        %545 = vmatprep.subr.mxu0 0.0
        %546 = vmatpush1.msra.mxu0 0.0
        %547 = vmatprep.subr.mxu0 0.0
        %548 = vmatpush1.msra.mxu0 0.0
        %549 = vmatprep.subr.mxu0 0.0
        %550 = vmatpush1.msra.mxu0 0.0
        %551 = vmatprep.subr.mxu0 0.0
        %552 = vmatpush1.msra.mxu0 0.0
        %553 = vmatprep.subr.mxu0 0.0
        %554 = vmatpush1.msra.mxu0 0.0
        %555 = vmatprep.subr.mxu0 0.0
        %556 = vmatpush1.msra.mxu0 0.0
        %557 = vmatprep.subr.mxu0 0.0
        %558 = vmatpush1.msra.mxu0 0.0
        %559 = vmatprep.subr.mxu0 0.0
        %560 = vmatpush1.msra.mxu0 0.0
        %561 = vmatprep.subr.mxu0 0.0
        %562 = vmatpush1.msra.mxu0 0.0
        %563 = vmatprep.subr.mxu0 0.0
        %564 = vmatpush1.msra.mxu0 0.0
        %565 = vmatprep.subr.mxu0 0.0
        %566 = vmatpush1.msra.mxu0 0.0
        %567 = vmatprep.subr.mxu0 0.0
        %568 = vmatpush1.msra.mxu0 0.0
        %569 = vmatprep.subr.mxu0 0.0
        %570 = vmatpush1.msra.mxu0 0.0
        %571 = vmatprep.subr.mxu0 0.0
        %572 = vmatpush1.msra.mxu0 0.0
        %573 = vmatprep.subr.mxu0 0.0
        %574 = vmatpush1.msra.mxu0 0.0
        %575 = vmatprep.subr.mxu0 0.0
        %576 = vmatpush1.msra.mxu0 0.0
        %577 = vmatprep.subr.mxu0 0.0
        %578 = vmatpush1.msra.mxu0 0.0
        %579 = vmatprep.subr.mxu0 0.0
        %580 = vmatpush1.msra.mxu0 0.0
        %581 = vmatprep.subr.mxu0 0.0
        %582 = vmatpush1.msra.mxu0 0.0
        %583 = vmatprep.subr.mxu0 0.0
        %584 = vmatpush1.msra.mxu0 0.0
        %585 = vmatprep.subr.mxu0 0.0
        %586 = vmatpush1.msra.mxu0 0.0
        %587 = vmatprep.subr.mxu0 0.0
        %588 = vmatpush1.msra.mxu0 0.0
        %589 = vmatprep.subr.mxu0 0.0
        %590 = vmatpush1.msra.mxu0 0.0
        %591 = vmatprep.subr.mxu0 0.0
        %592 = vmatpush1.msra.mxu0 0.0
        %593 = vmatprep.subr.mxu0 0.0
        %594 = vmatpush1.msra.mxu0 0.0
        %595 = vmatprep.subr.mxu0 0.0
        %596 = vmatpush1.msra.mxu0 0.0
        %597 = vmatprep.subr.mxu0 0.0
        %598 = vmatpush1.msra.mxu0 0.0
        %599 = vmatprep.subr.mxu0 0.0
        %600 = vmatpush1.msra.mxu0 0.0
        %601 = vmatprep.subr.mxu0 0.0
        %602 = vmatpush1.msra.mxu0 0.0
        %603 = vmatprep.subr.mxu0 0.0
        %604 = vmatpush1.msra.mxu0 0.0
        %605 = vmatprep.subr.mxu0 0.0
        %606 = vmatpush1.msra.mxu0 0.0
        %607 = vmatprep.mubr.f32.mxu0 0.0
        %608 = vmatmul.mubr.f32.gmra.mrb[0].mxu0 %v541
        %v609 = vpop.f32.mrb[0].mxu0
        %v610 = vadd.f32 0.0, %v609
        %v611 = vpop.f32.mrb[0].mxu0
        %612 = vdwg.mxu0
        %613 = vrot.lane.b32.xlu0 %v360, 96
        %v614 = vpop.permute.xlu0 %613
        %v617 = vsel %vm518, %v530, 0
        %619 = vmatprep.subr.mxu0 0.0
        %620 = vmatpush1.msra.mxu0 %v614
        %621 = vmatprep.subr.mxu0 0.0
        %622 = vmatpush1.msra.mxu0 0.0
        %623 = vmatprep.subr.mxu0 0.0
        %624 = vmatpush1.msra.mxu0 0.0
        %625 = vmatprep.subr.mxu0 0.0
        %626 = vmatpush1.msra.mxu0 0.0
        %627 = vmatprep.subr.mxu0 0.0
        %628 = vmatpush1.msra.mxu0 0.0
        %629 = vmatprep.subr.mxu0 0.0
        %630 = vmatpush1.msra.mxu0 0.0
        %631 = vmatprep.subr.mxu0 0.0
        %632 = vmatpush1.msra.mxu0 0.0
        %633 = vmatprep.subr.mxu0 0.0
        %634 = vmatpush1.msra.mxu0 0.0
        %635 = vmatprep.subr.mxu0 0.0
        %636 = vmatpush1.msra.mxu0 0.0
        %637 = vmatprep.subr.mxu0 0.0
        %638 = vmatpush1.msra.mxu0 0.0
        %639 = vmatprep.subr.mxu0 0.0
        %640 = vmatpush1.msra.mxu0 0.0
        %641 = vmatprep.subr.mxu0 0.0
        %642 = vmatpush1.msra.mxu0 0.0
        %643 = vmatprep.subr.mxu0 0.0
        %644 = vmatpush1.msra.mxu0 0.0
        %645 = vmatprep.subr.mxu0 0.0
        %646 = vmatpush1.msra.mxu0 0.0
        %647 = vmatprep.subr.mxu0 0.0
        %648 = vmatpush1.msra.mxu0 0.0
        %649 = vmatprep.subr.mxu0 0.0
        %650 = vmatpush1.msra.mxu0 0.0
        %651 = vmatprep.subr.mxu0 0.0
        %652 = vmatpush1.msra.mxu0 0.0
        %653 = vmatprep.subr.mxu0 0.0
        %654 = vmatpush1.msra.mxu0 0.0
        %655 = vmatprep.subr.mxu0 0.0
        %656 = vmatpush1.msra.mxu0 0.0
        %657 = vmatprep.subr.mxu0 0.0
        %658 = vmatpush1.msra.mxu0 0.0
        %659 = vmatprep.subr.mxu0 0.0
        %660 = vmatpush1.msra.mxu0 0.0
        %661 = vmatprep.subr.mxu0 0.0
        %662 = vmatpush1.msra.mxu0 0.0
        %663 = vmatprep.subr.mxu0 0.0
        %664 = vmatpush1.msra.mxu0 0.0
        %665 = vmatprep.subr.mxu0 0.0
        %666 = vmatpush1.msra.mxu0 0.0
        %667 = vmatprep.subr.mxu0 0.0
        %668 = vmatpush1.msra.mxu0 0.0
        %669 = vmatprep.subr.mxu0 0.0
        %670 = vmatpush1.msra.mxu0 0.0
        %671 = vmatprep.subr.mxu0 0.0
        %672 = vmatpush1.msra.mxu0 0.0
        %673 = vmatprep.subr.mxu0 0.0
        %674 = vmatpush1.msra.mxu0 0.0
        %675 = vmatprep.subr.mxu0 0.0
        %676 = vmatpush1.msra.mxu0 0.0
        %677 = vmatprep.subr.mxu0 0.0
        %678 = vmatpush1.msra.mxu0 0.0
        %679 = vmatprep.subr.mxu0 0.0
        %680 = vmatpush1.msra.mxu0 0.0
        %681 = vmatprep.subr.mxu0 0.0
        %682 = vmatpush1.msra.mxu0 0.0
        %683 = vmatprep.mubr.f32.mxu0 0.0
        %684 = vmatmul.mubr.f32.gmra.mrb[0].mxu0 %v617
        %v685 = vpop.f32.mrb[0].mxu0
        %v686 = vadd.f32 0.0, %v685
        %v687 = vpop.f32.mrb[0].mxu0
        %688 = vdwg.mxu0
        %v689 = vrcp.pop %v533
        %v690 = vrcp.pop %v536
        %v691 = vmul.f32 %v610, %v689
        %v692 = vmul.f32 %v686, %v690
        %v693 = vld [vmem:[#allocation2] sm:$0xff]
        %v694 = vld [vmem:[#allocation2 + $0x8] sm:$0xff]
        %s695 = smul.u32 %s27, 16
        %s696 = scalar_lea.vmem [#allocation8], %s695
        %v697 = vld [vmem:[%s696] sm:$0xff]
        %v698 = vld [vmem:[%s696 + $0x8] sm:$0xff]
        %v700 = vsel %vm366, %v691, 0
        %v703 = vsel %vm366, %v692, 0
        %705 = vmatprep.subr.mxu0 0.0
        %706 = vmatpush1.msra.mxu0 %v697
        %707 = vmatprep.subr.mxu0 0.0
        %708 = vmatpush1.msra.mxu0 %v698
        %709 = vmatprep.subr.mxu0 0.0
        %710 = vmatpush1.msra.mxu0 0.0
        %711 = vmatprep.subr.mxu0 0.0
        %712 = vmatpush1.msra.mxu0 0.0
        %713 = vmatprep.subr.mxu0 0.0
        %714 = vmatpush1.msra.mxu0 0.0
        %715 = vmatprep.subr.mxu0 0.0
        %716 = vmatpush1.msra.mxu0 0.0
        %717 = vmatprep.subr.mxu0 0.0
        %718 = vmatpush1.msra.mxu0 0.0
        %719 = vmatprep.subr.mxu0 0.0
        %720 = vmatpush1.msra.mxu0 0.0
        %721 = vmatprep.subr.mxu0 0.0
        %722 = vmatpush1.msra.mxu0 0.0
        %723 = vmatprep.subr.mxu0 0.0
        %724 = vmatpush1.msra.mxu0 0.0
        %725 = vmatprep.subr.mxu0 0.0
        %726 = vmatpush1.msra.mxu0 0.0
        %727 = vmatprep.subr.mxu0 0.0
        %728 = vmatpush1.msra.mxu0 0.0
        %729 = vmatprep.subr.mxu0 0.0
        %730 = vmatpush1.msra.mxu0 0.0
        %731 = vmatprep.subr.mxu0 0.0
        %732 = vmatpush1.msra.mxu0 0.0
        %733 = vmatprep.subr.mxu0 0.0
        %734 = vmatpush1.msra.mxu0 0.0
        %735 = vmatprep.subr.mxu0 0.0
        %736 = vmatpush1.msra.mxu0 0.0
        %737 = vmatprep.subr.mxu0 0.0
        %738 = vmatpush1.msra.mxu0 0.0
        %739 = vmatprep.subr.mxu0 0.0
        %740 = vmatpush1.msra.mxu0 0.0
        %741 = vmatprep.subr.mxu0 0.0
        %742 = vmatpush1.msra.mxu0 0.0
        %743 = vmatprep.subr.mxu0 0.0
        %744 = vmatpush1.msra.mxu0 0.0
        %745 = vmatprep.subr.mxu0 0.0
        %746 = vmatpush1.msra.mxu0 0.0
        %747 = vmatprep.subr.mxu0 0.0
        %748 = vmatpush1.msra.mxu0 0.0
        %749 = vmatprep.subr.mxu0 0.0
        %750 = vmatpush1.msra.mxu0 0.0
        %751 = vmatprep.subr.mxu0 0.0
        %752 = vmatpush1.msra.mxu0 0.0
        %753 = vmatprep.subr.mxu0 0.0
        %754 = vmatpush1.msra.mxu0 0.0
        %755 = vmatprep.subr.mxu0 0.0
        %756 = vmatpush1.msra.mxu0 0.0
        %757 = vmatprep.subr.mxu0 0.0
        %758 = vmatpush1.msra.mxu0 0.0
        %759 = vmatprep.subr.mxu0 0.0
        %760 = vmatpush1.msra.mxu0 0.0
        %761 = vmatprep.subr.mxu0 0.0
        %762 = vmatpush1.msra.mxu0 0.0
        %763 = vmatprep.subr.mxu0 0.0
        %764 = vmatpush1.msra.mxu0 0.0
        %765 = vmatprep.subr.mxu0 0.0
        %766 = vmatpush1.msra.mxu0 0.0
        %767 = vmatprep.subr.mxu0 0.0
        %768 = vmatpush1.msra.mxu0 0.0
        %769 = vmatprep.mubr.f32.mxu0 0.0
        %770 = vmatmul.mubr.f32.gmra.mrb[0].mxu0 %v700
        %v771 = vpop.f32.mrb[0].mxu0
        %v772 = vadd.f32 0.0, %v771
        %v773 = vpop.f32.mrb[0].mxu0
        %774 = vmatprep.mubr.f32.mxu0 0.0
        %775 = vmatmul.mubr.f32.gmra.mrb[0].mxu0 %v703
        %v776 = vpop.f32.mrb[0].mxu0
        %v777 = vadd.f32 0.0, %v776
        %v778 = vpop.f32.mrb[0].mxu0
        %779 = vdwg.mxu0
        %v780 = vadd.f32 %v693, %v772
        %v781 = vadd.f32 %v694, %v777
        %782 = vst.msk [vmem:[#allocation2] sm:$0xff] %vm281, %v780
        %783 = vst.msk [vmem:[#allocation2 + $0x8] sm:$0xff] %vm281, %v781
        %p784 = scmp.eq.s32.totalorder %s27, 7
        // Predicated region
        $region53: #{tpu_custom_call.1} parent=35 // pred_check
          %p785 = pneg %p784
        $region54: #{tpu_custom_call.1} parent=35 // pred_check_branch
          %787 = sbr.rel (%p785) target = $region56
        $region55: #{tpu_custom_call.1} parent=35 // pred_region
          %v788 = vld [vmem:[#allocation2] sm:$0xff]
          %v789 = vld [vmem:[#allocation2 + $0x8] sm:$0xff]
          %790 = vst.msk [vmem:[%s256] sm:$0xff] %vm281, %v788
          %791 = vst.msk [vmem:[%s256 + $0x8] sm:$0xff] %vm281, %v789
        $region56: #{tpu_custom_call.1} parent=35 // pred_fallthru
          _
        %s792 = sand.u32 %s131, 1
        %s793 = scalar_lea.sflag [#allocation5], %s792
        %s794 = sand.u32 %s131, 1
        %s795 = smul.addr %s794, 16
        %s796 = scalar_lea.vmem [#allocation9], %s795
        // Predicated region
        $region57: #{tpu_custom_call.1} parent=35 // pred_check
          %p797 = pneg %p141
        $region58: #{tpu_custom_call.1} parent=35 // pred_check_branch
          %799 = sbr.rel (%p797) target = $region60
        $region59: #{tpu_custom_call.1} parent=35 // pred_region
          %s800 = smul.u32 2, %s26
          %s802 = ssub.s32 256, 256
          %803 = vsyncadd %s793, %s802
          %s804 = smul.addr %s800, 128
          %s805 = scalar_lea.hbm %s4, %s804
          %s806 = sshll.u32 %s796, 4
          %s807 = int_to_ptr.vmem [resolvable:$true] %s806
          %812 = dma.vmem_to_hbm [thread:$0]  %s807, 256, %s805, %s793, 128, 128, 8
        $region60: #{tpu_custom_call.1} parent=35 // pred_fallthru
          _
      $region36: #{tpu_custom_call.1} parent=5 // pred_fallthru
        _
      %p813 = scmp.le.s32.totalorder 2, %s17
      // Predicated region
      $region61: #{tpu_custom_call.1} parent=5 // pred_check
        %p814 = pneg %p813
      $region62: #{tpu_custom_call.1} parent=5 // pred_check_branch
        %816 = sbr.rel (%p814) target = $region64
      $region63: #{tpu_custom_call.1} parent=5 // pred_region
        %s817 = ssub.s32 %s17, 2
        // Predicated region
        $region65: #{tpu_custom_call.1} parent=63 // pred_check
          %p818 = pneg %p147
        $region66: #{tpu_custom_call.1} parent=63 // pred_check_branch
          %820 = sbr.rel (%p818) target = $region68
        $region67: #{tpu_custom_call.1} parent=63 // pred_region
          %s821 = sand.u32 %s132, 1
          %s822 = scalar_lea.sflag [#allocation5], %s821
          %s823 = sand.u32 %s132, 1
          %s824 = smul.addr %s823, 16
          %s825 = scalar_lea.vmem [#allocation9], %s824
          %826 = dma.done %s822, 256
        $region68: #{tpu_custom_call.1} parent=63 // pred_fallthru
          _
      $region64: #{tpu_custom_call.1} parent=5 // pred_fallthru
        _
    $region6: #{tpu_custom_call.1} parent=1 // loop_footer
      %s21 = sadd.s32 1, %s17
    $region7: #{tpu_custom_call.1} parent=1 // loop_footer_branch
      %16 = sbr.rel target = $region3
    $region8: #{tpu_custom_call.1} parent=1 // loop_exit
      _
    %827 = vsyncpa [#allocation4], 1
    %s828 = scalar_lea.sflag [#allocation4], 1
    %829 = vsyncpa %s828, 1
    %830 = vsyncpa [#allocation7], 1
    %831 = vsyncpa [#allocation5], 1
    %s832 = scalar_lea.sflag [#allocation5], 1
    %833 = vsyncpa %s832, 1

</llo_original>
